<compile_context>
chip_gen: v5e
topology: v5e:2x2
jax: 0.10.0
libtpu: 0.0.40
codegen_flags: <defaults>
</compile_context>

<pallas_src>
import functools

import jax
import jax.numpy as jnp
from jax import lax
from jax.experimental import pallas as pl
from jax.experimental.pallas import tpu as pltpu


_VMEM_LIMIT = 32 * 1024 * 1024          # safe cap on v5e/v6e/v7x
_FUSED_VMEM_BUDGET = 8 * 1024 * 1024    # fast-path threshold (double-buffered)


def _round_up(a, b):
    return (a + b - 1) // b * b


def _pick_tile_n(n, d):
    """Rows per tile: ~2 MiB of x payload, capped by a ~8 MiB VMEM budget."""
    d_lanes = _round_up(d, 128)
    itemsize = 4
    target_rows = max((2 * 1024 * 1024) // max(d * itemsize, 1), 8)
    # double-buffered (x tile + lane-padded (tile_n, 1) output tile)
    per_row_vmem = (d_lanes + 128) * 4 * 2
    cap_rows = max((8 * 1024 * 1024) // per_row_vmem, 8)
    rows = max(8, min(target_rows, cap_rows, _round_up(n, 8)))
    return _round_up(rows, 8)


# ---------------------------------------------------------------------------
# Fast path: whole problem VMEM-resident, single fused kernel.
# ---------------------------------------------------------------------------
def _fused_kernel(x_ref, w_ref, b_ref, o_ref):
    x = x_ref[...].astype(jnp.float32)                       # (N, D)
    m = jnp.mean(x, axis=0, keepdims=True)                   # (1, D)
    xc = x - m
    var = jnp.mean(xc * xc, axis=0, keepdims=True)           # (1, D), >= 0
    w_eff = w_ref[...].astype(jnp.float32) * lax.rsqrt(var)  # (1, D)
    y = jnp.sum(xc * w_eff, axis=1, keepdims=True) + b_ref[0, 0]
    o_ref[...] = y.astype(o_ref.dtype)


def _fused_call(x, w_row, b_smem, n, d):
    return pl.pallas_call(
        _fused_kernel,
        grid=(1,),
        in_specs=[
            pl.BlockSpec((n, d), lambda i: (0, 0)),
            pl.BlockSpec((1, d), lambda i: (0, 0)),
            pl.BlockSpec(memory_space=pltpu.MemorySpace.SMEM),
        ],
        out_specs=pl.BlockSpec((n, 1), lambda i: (0, 0)),
        out_shape=jax.ShapeDtypeStruct((n, 1), jnp.float32),
        compiler_params=pltpu.CompilerParams(
            dimension_semantics=("arbitrary",),
            vmem_limit_bytes=_VMEM_LIMIT),
        cost_estimate=pl.CostEstimate(
            flops=7 * n * d,
            transcendentals=d,
            bytes_accessed=x.dtype.itemsize * n * d + 4 * n + 8 * d),
    )(x, w_row, b_smem)


# ---------------------------------------------------------------------------
# Two-pass path (large N): masked streaming stats + fold + streaming matvec.
# ---------------------------------------------------------------------------
def _stats_kernel(x_ref, sum_ref, sumsq_ref, *, tile_n, n_rows):
    i = pl.program_id(0)

    @pl.when(i == 0)
    def _():
        sum_ref[...] = jnp.zeros_like(sum_ref)
        sumsq_ref[...] = jnp.zeros_like(sumsq_ref)

    x = x_ref[...].astype(jnp.float32)                        # (tile_n, D)
    # Ragged final tile: out-of-bounds rows hold unspecified data — zero them
    # before accumulating so sums stay exact (no wrapper-side padding copy).
    row = i * tile_n + lax.broadcasted_iota(jnp.int32, x.shape, 0)
    x = jnp.where(row < n_rows, x, 0.0)
    sum_ref[...] += jnp.sum(x, axis=0, keepdims=True)         # (1, D)
    sumsq_ref[...] += jnp.sum(x * x, axis=0, keepdims=True)   # (1, D)


def _matvec_kernel(w_ref, b_ref, x_ref, o_ref):
    # Pure streaming matvec: normalization already folded into w_eff / b_eff.
    # (Garbage rows of a ragged final tile only affect their own output rows,
    # whose out-of-bounds stores Pallas drops.)
    x = x_ref[...].astype(jnp.float32)                        # (tile_n, D)
    y = jnp.dot(x, w_ref[...], preferred_element_type=jnp.float32)  # MXU
    o_ref[...] = (y + b_ref[0, 0]).astype(o_ref.dtype)


def regressor_forward(x, weight, bias, *, tile_n=None, force_two_pass=False):
    """x: (N, D), weight: (1, D), bias: ()  ->  (N, 1) f32."""
    n, d = x.shape
    w_row = jnp.reshape(weight, (1, d)).astype(jnp.float32)
    b_smem = jnp.reshape(bias, (1, 1)).astype(jnp.float32)

    d_lanes = _round_up(d, 128)
    fused_bytes = 2 * _round_up(n, 8) * (d_lanes + 128) * 4
    if not force_two_pass and fused_bytes <= _FUSED_VMEM_BUDGET:
        return _fused_call(x, w_row, b_smem, n, d)

    if tile_n is None:
        tile_n = _pick_tile_n(n, d)
    tile_n = _round_up(min(tile_n, _round_up(n, 8)), 8)
    num_tiles = pl.cdiv(n, tile_n)

    x_spec = pl.BlockSpec((tile_n, d), lambda i: (i, 0))
    stat_spec = pl.BlockSpec((1, d), lambda i: (0, 0))

    # Pass 1: per-feature sum / sum-of-squares (accumulated across N tiles).
    xsum, xsq = pl.pallas_call(
        functools.partial(_stats_kernel, tile_n=tile_n, n_rows=n),
        grid=(num_tiles,),
        in_specs=[x_spec],
        out_specs=[stat_spec, stat_spec],
        out_shape=[jax.ShapeDtypeStruct((1, d), jnp.float32)] * 2,
        compiler_params=pltpu.CompilerParams(
            dimension_semantics=("arbitrary",),
            vmem_limit_bytes=_VMEM_LIMIT),
        cost_estimate=pl.CostEstimate(
            flops=3 * n * d,
            transcendentals=0,
            bytes_accessed=x.dtype.itemsize * n * d + 8 * d),
    )(x)

    # Fold normalization into the weight/bias (tiny O(D) wrapper op, hoisted
    # out of the per-tile loop). Clamp var: E[x^2]-m^2 can go slightly
    # negative under cancellation.
    inv_n = jnp.float32(1.0 / n)
    m = xsum * inv_n
    var = jnp.maximum(xsq * inv_n - m * m, 0.0)
    w_eff = w_row * lax.rsqrt(var)                            # (1, D)
    b_eff = b_smem - jnp.sum(m * w_eff, axis=1, keepdims=True)  # (1, 1)
    w_col = jnp.transpose(w_eff)                              # (D, 1)

    # Pass 2: stream N tiles through the folded matvec.
    y = pl.pallas_call(
        _matvec_kernel,
        grid=(num_tiles,),
        in_specs=[
            pl.BlockSpec((d, 1), lambda i: (0, 0)),            # w_eff column
            pl.BlockSpec(memory_space=pltpu.MemorySpace.SMEM),  # b_eff scalar
            x_spec,                                             # x tile
        ],
        out_specs=pl.BlockSpec((tile_n, 1), lambda i: (i, 0)),
        out_shape=jax.ShapeDtypeStruct((n, 1), jnp.float32),
        compiler_params=pltpu.CompilerParams(
            dimension_semantics=("parallel",),
            vmem_limit_bytes=_VMEM_LIMIT),
        cost_estimate=pl.CostEstimate(
            flops=2 * n * d,
            transcendentals=0,
            bytes_accessed=x.dtype.itemsize * n * d + 4 * n + 4 * d),
    )(w_col, b_eff, x)
    return y


def _reference_forward(x, weight, bias):
    m = jnp.mean(x, axis=0, keepdims=True)
    s = jnp.sqrt(jnp.mean((x - m) ** 2, axis=0, keepdims=True))
    xn = (x - m) / s
    return xn @ weight.T + bias


if __name__ == "__main__":
    # Shapes consistent with the module: batch N=200, input_dim D=32.
    N, D = 200, 32
    key = jax.random.PRNGKey(0)
    kx, kw, kb = jax.random.split(key, 3)

    x = jax.random.normal(kx, (N, D), dtype=jnp.float32) * 2.0 + 0.5

    # PyTorch Linear default init: U(-1/sqrt(D), 1/sqrt(D)).
    bound = 1.0 / (D ** 0.5)
    weight = jax.random.uniform(kw, (1, D), jnp.float32, -bound, bound)
    bias = jax.random.uniform(kb, (), jnp.float32, -bound, bound)

    y_ref = _reference_forward(x, weight, bias)

    # Fast path: single fused VMEM-resident kernel (the regime these shapes are in).
    y_fast = regressor_forward(x, weight, bias)
    jax.block_until_ready(y_fast)
    assert y_fast.shape == (N, 1)
    assert jnp.allclose(y_fast, y_ref, atol=1e-4, rtol=1e-4)

    # Two-pass streaming path: multi-tile grid + ragged final tile handled by
    # in-kernel masking (no wrapper-side padding copy).
    y_tiled = regressor_forward(x, weight, bias, tile_n=64, force_two_pass=True)
    jax.block_until_ready(y_tiled)
    assert y_tiled.shape == (N, 1)
    assert jnp.allclose(y_tiled, y_ref, atol=1e-4, rtol=1e-4)

    print("KERNEL_OK")
</pallas_src>

<mosaic_0001>
module attributes {stable_mosaic.version = 11 : i64} {
  func.func @_fused_kernel(%arg0: i32, %arg1: memref<200x32xf32, #tpu.memory_space<vmem>>, %arg2: memref<1x32xf32, #tpu.memory_space<vmem>>, %arg3: memref<1x1xf32, #tpu.memory_space<smem>>, %arg4: memref<200x1xf32, #tpu.memory_space<vmem>>) attributes {dimension_semantics = [#tpu.dimension_semantics<arbitrary>], iteration_bounds = array<i64: 1>, scalar_prefetch = 0 : i64, scratch_operands = 0 : i64, tpu.core_type = #tpu.core_type<tc>, window_params = [{pipeline_mode = #tpu.pipeline_mode<synchronous>, transform_indices = @transform_0, window_bounds = array<i64: 200, 32>}, {pipeline_mode = #tpu.pipeline_mode<synchronous>, transform_indices = @transform_1, window_bounds = array<i64: 1, 32>}, {transform_indices = @transform_2, window_bounds = array<i64: 1, 1>}, {pipeline_mode = #tpu.pipeline_mode<synchronous>, transform_indices = @transform_3, window_bounds = array<i64: 200, 1>}]} {
    %c0 = arith.constant 0 : index
    %c0_0 = arith.constant 0 : index
    %0 = vector.load %arg1[%c0, %c0_0] : memref<200x32xf32, #tpu.memory_space<vmem>>, vector<200x32xf32>
    %cst = arith.constant dense<0.000000e+00> : vector<32xf32>
    %1 = vector.multi_reduction <add>, %0, %cst [0] : vector<200x32xf32> to vector<32xf32>
    %2 = vector.shape_cast %1 : vector<32xf32> to vector<1x32xf32>
    %cst_1 = arith.constant 2.000000e+02 : f32
    %3 = vector.broadcast %cst_1 : f32 to vector<1x32xf32>
    %4 = arith.divf %2, %3 : vector<1x32xf32>
    %5 = vector.broadcast %4 : vector<1x32xf32> to vector<200x32xf32>
    %6 = arith.subf %0, %5 : vector<200x32xf32>
    %7 = arith.mulf %6, %6 : vector<200x32xf32>
    %cst_2 = arith.constant dense<0.000000e+00> : vector<32xf32>
    %8 = vector.multi_reduction <add>, %7, %cst_2 [0] : vector<200x32xf32> to vector<32xf32>
    %9 = vector.shape_cast %8 : vector<32xf32> to vector<1x32xf32>
    %cst_3 = arith.constant 2.000000e+02 : f32
    %10 = vector.broadcast %cst_3 : f32 to vector<1x32xf32>
    %11 = arith.divf %9, %10 : vector<1x32xf32>
    %c0_4 = arith.constant 0 : index
    %c0_5 = arith.constant 0 : index
    %12 = vector.load %arg2[%c0_4, %c0_5] : memref<1x32xf32, #tpu.memory_space<vmem>>, vector<1x32xf32>
    %13 = math.rsqrt %11 : vector<1x32xf32>
    %14 = arith.mulf %12, %13 : vector<1x32xf32>
    %15 = vector.broadcast %14 : vector<1x32xf32> to vector<200x32xf32>
    %16 = arith.mulf %6, %15 : vector<200x32xf32>
    %cst_6 = arith.constant dense<0.000000e+00> : vector<200xf32>
    %17 = vector.multi_reduction <add>, %16, %cst_6 [1] : vector<200x32xf32> to vector<200xf32>
    %18 = vector.shape_cast %17 : vector<200xf32> to vector<200x1xf32>
    %c0_7 = arith.constant 0 : index
    %c0_8 = arith.constant 0 : index
    %19 = memref.load %arg3[%c0_7, %c0_8] : memref<1x1xf32, #tpu.memory_space<smem>>
    %20 = vector.broadcast %19 : f32 to vector<200x1xf32>
    %21 = arith.addf %18, %20 : vector<200x1xf32>
    %c0_9 = arith.constant 0 : index
    %c0_10 = arith.constant 0 : index
    %22 = vector.load %arg4[%c0_9, %c0_10] : memref<200x1xf32, #tpu.memory_space<vmem>>, vector<200x1xf32>
    tpu.vector_store %arg4[%c0_9, %c0_10], %21 {strides = array<i32>} : memref<200x1xf32, #tpu.memory_space<vmem>>, vector<200x1xf32>,
    return
  }
  func.func @transform_0(%arg0: i32) -> (i32, i32) {
    %c0_i32 = arith.constant 0 : i32
    %c0_i32_0 = arith.constant 0 : i32
    %c0_i32_1 = arith.constant 0 : i32
    return %c0_i32, %c0_i32_0 : i32, i32
  }
  func.func @transform_1(%arg0: i32) -> (i32, i32) {
    %c0_i32 = arith.constant 0 : i32
    %c0_i32_0 = arith.constant 0 : i32
    %c0_i32_1 = arith.constant 0 : i32
    return %c0_i32, %c0_i32_0 : i32, i32
  }
  func.func @transform_2(%arg0: i32) -> (i32, i32) {
    %c0_i32 = arith.constant 0 : i32
    %c0_i32_0 = arith.constant 0 : i32
    %c0_i32_1 = arith.constant 0 : i32
    return %c0_i32, %c0_i32_0 : i32, i32
  }
  func.func @transform_3(%arg0: i32) -> (i32, i32) {
    %c0_i32 = arith.constant 0 : i32
    %c0_i32_0 = arith.constant 0 : i32
    %c0_i32_1 = arith.constant 0 : i32
    return %c0_i32, %c0_i32_0 : i32, i32
  }
}

</mosaic_0001>

<llo_original>
// kernel: tpu_custom_call.1
$region0: #{tpu_custom_call.1}
  #allocation0 [shape = 'u32[]', space=smem, size = 0x4, offset = 0x4, fixed_abs, tag = 'smem constant byte address 0x4 - core index']
  #allocation1 [shape = 'u32[72,128]{1,0:T(1,128)}', space=vmem, size = 0x9000, scoped, tag = 'internal scratch']
  #allocation2 [shape = 'f32[1,1]{1,0:T(1,128)S(6)}', space=smem, size = 0x200, scoped, tag = 'scoped memory for tpu_custom_call.1']
  %s0 = inlined_call_operand.vmem [shape: f32[200,32], index: 0, kind: input, shape index: {}]
  %s1 = inlined_call_operand.vmem [shape: f32[1,32], index: 1, kind: input, shape index: {}]
  %s2 = inlined_call_operand.<no memory space> [shape: f32[1,1], index: 2, kind: input, shape index: {}]
  %s3 = inlined_call_operand.vmem [shape: f32[200,1], index: 3, kind: output, shape index: {}]
  %s4 = sld [smem:[#allocation0]]
  $region22: #{tpu_custom_call.1} parent=0
    _
  %s6 = ssub.s32 1, %s4
  %s7 = scalar_select 0, %s6, %s4
  %8 = sst [smem:[#allocation2]] %s2
  // Predicated region
  $region2: #{tpu_custom_call.1} parent=0 // pred_check
    _
  $region3: #{tpu_custom_call.1} parent=0 // pred_check_branch
    %10 = sbr.rel (0) target = $region5
  $region4: #{tpu_custom_call.1} parent=0 // pred_region
    _
  $region5: #{tpu_custom_call.1} parent=0 // pred_fallthru
    _
  // Predicated region
  $region6: #{tpu_custom_call.1} parent=0 // pred_check
    _
  $region7: #{tpu_custom_call.1} parent=0 // pred_check_branch
    %12 = sbr.rel (0) target = $region9
  $region8: #{tpu_custom_call.1} parent=0 // pred_region
    _
  $region9: #{tpu_custom_call.1} parent=0 // pred_fallthru
    _
  // Predicated region
  $region10: #{tpu_custom_call.1} parent=0 // pred_check
    _
  $region11: #{tpu_custom_call.1} parent=0 // pred_check_branch
    %14 = sbr.rel (0) target = $region13
  $region12: #{tpu_custom_call.1} parent=0 // pred_region
    _
  $region13: #{tpu_custom_call.1} parent=0 // pred_fallthru
    _
  %v15 = vld [vmem:[%s0] sm:$0xff]
  %v16 = vld [vmem:[%s0 + $0x8] sm:$0xff]
  %v17 = vld [vmem:[%s0 + $0x10] sm:$0xff]
  %v18 = vld [vmem:[%s0 + $0x18] sm:$0xff]
  %v19 = vld [vmem:[%s0 + $0x20] sm:$0xff]
  %v20 = vld [vmem:[%s0 + $0x28] sm:$0xff]
  %v21 = vld [vmem:[%s0 + $0x30] sm:$0xff]
  %v22 = vld [vmem:[%s0 + $0x38] sm:$0xff]
  %v23 = vld [vmem:[%s0 + $0x40] sm:$0xff]
  %v24 = vld [vmem:[%s0 + $0x48] sm:$0xff]
  %v25 = vld [vmem:[%s0 + $0x50] sm:$0xff]
  %v26 = vld [vmem:[%s0 + $0x58] sm:$0xff]
  %v27 = vld [vmem:[%s0 + $0x60] sm:$0xff]
  %v28 = vld [vmem:[%s0 + $0x68] sm:$0xff]
  %v29 = vld [vmem:[%s0 + $0x70] sm:$0xff]
  %v30 = vld [vmem:[%s0 + $0x78] sm:$0xff]
  %v31 = vld [vmem:[%s0 + $0x80] sm:$0xff]
  %v32 = vld [vmem:[%s0 + $0x88] sm:$0xff]
  %v33 = vld [vmem:[%s0 + $0x90] sm:$0xff]
  %v34 = vld [vmem:[%s0 + $0x98] sm:$0xff]
  %v35 = vld [vmem:[%s0 + $0xa0] sm:$0xff]
  %v36 = vld [vmem:[%s0 + $0xa8] sm:$0xff]
  %v37 = vld [vmem:[%s0 + $0xb0] sm:$0xff]
  %v38 = vld [vmem:[%s0 + $0xb8] sm:$0xff]
  %v39 = vld [vmem:[%s0 + $0xc0] sm:$0xff]
  %vm40 = vcmask 261120
  %v41 = vsel %vm40, %v15, 0.0
  %v42 = vsel %vm40, %v16, 0.0
  %v43 = vadd.f32 %v41, %v42
  %v44 = vsel %vm40, %v17, 0.0
  %v45 = vadd.f32 %v43, %v44
  %v46 = vsel %vm40, %v18, 0.0
  %v47 = vadd.f32 %v45, %v46
  %v48 = vsel %vm40, %v19, 0.0
  %v49 = vadd.f32 %v47, %v48
  %v50 = vsel %vm40, %v20, 0.0
  %v51 = vadd.f32 %v49, %v50
  %v52 = vsel %vm40, %v21, 0.0
  %v53 = vadd.f32 %v51, %v52
  %v54 = vsel %vm40, %v22, 0.0
  %v55 = vadd.f32 %v53, %v54
  %v56 = vsel %vm40, %v23, 0.0
  %v57 = vadd.f32 %v55, %v56
  %v58 = vsel %vm40, %v24, 0.0
  %v59 = vadd.f32 %v57, %v58
  %v60 = vsel %vm40, %v25, 0.0
  %v61 = vadd.f32 %v59, %v60
  %v62 = vsel %vm40, %v26, 0.0
  %v63 = vadd.f32 %v61, %v62
  %v64 = vsel %vm40, %v27, 0.0
  %v65 = vadd.f32 %v63, %v64
  %v66 = vsel %vm40, %v28, 0.0
  %v67 = vadd.f32 %v65, %v66
  %v68 = vsel %vm40, %v29, 0.0
  %v69 = vadd.f32 %v67, %v68
  %v70 = vsel %vm40, %v30, 0.0
  %v71 = vadd.f32 %v69, %v70
  %v72 = vsel %vm40, %v31, 0.0
  %v73 = vadd.f32 %v71, %v72
  %v74 = vsel %vm40, %v32, 0.0
  %v75 = vadd.f32 %v73, %v74
  %v76 = vsel %vm40, %v33, 0.0
  %v77 = vadd.f32 %v75, %v76
  %v78 = vsel %vm40, %v34, 0.0
  %v79 = vadd.f32 %v77, %v78
  %v80 = vsel %vm40, %v35, 0.0
  %v81 = vadd.f32 %v79, %v80
  %v82 = vsel %vm40, %v36, 0.0
  %v83 = vadd.f32 %v81, %v82
  %v84 = vsel %vm40, %v37, 0.0
  %v85 = vadd.f32 %v83, %v84
  %v86 = vsel %vm40, %v38, 0.0
  %v87 = vadd.f32 %v85, %v86
  %v88 = vsel %vm40, %v39, 0.0
  %v89 = vadd.f32 %v87, %v88
  %v90 = vrot.slane %v89, 4
  %v91 = vadd.f32 %v89, %v90
  %v92 = vrot.slane %v91, 2
  %v93 = vadd.f32 %v91, %v92
  %v94 = vrot.slane %v93, 1
  %v95 = vadd.f32 %v93, %v94
  %v96 = vrcp.pop 200.0
  %v97 = vmul.f32 200.0, %v96
  %v98 = vsub.f32 1.0, %v97
  %v99 = vmul.f32 %v96, %v98
  %v100 = vadd.f32 %v96, %v99
  %vm101 = vweird.f32 %v96
  %v102 = vsel %vm101, %v96, %v100
  %v103 = vmul.f32 %v95, %v102
  %v104 = vsub.f32 %v15, %v103
  %v105 = vsub.f32 %v16, %v103
  %v106 = vsub.f32 %v17, %v103
  %v107 = vsub.f32 %v18, %v103
  %v108 = vsub.f32 %v19, %v103
  %v109 = vsub.f32 %v20, %v103
  %v110 = vsub.f32 %v21, %v103
  %v111 = vsub.f32 %v22, %v103
  %v112 = vsub.f32 %v23, %v103
  %v113 = vsub.f32 %v24, %v103
  %v114 = vsub.f32 %v25, %v103
  %v115 = vsub.f32 %v26, %v103
  %v116 = vsub.f32 %v27, %v103
  %v117 = vsub.f32 %v28, %v103
  %v118 = vsub.f32 %v29, %v103
  %v119 = vsub.f32 %v30, %v103
  %v120 = vsub.f32 %v31, %v103
  %v121 = vsub.f32 %v32, %v103
  %v122 = vsub.f32 %v33, %v103
  %v123 = vsub.f32 %v34, %v103
  %v124 = vsub.f32 %v35, %v103
  %v125 = vsub.f32 %v36, %v103
  %v126 = vsub.f32 %v37, %v103
  %v127 = vsub.f32 %v38, %v103
  %v128 = vsub.f32 %v39, %v103
  %v129 = vmul.f32 %v104, %v104
  %v130 = vmul.f32 %v105, %v105
  %v131 = vmul.f32 %v106, %v106
  %v132 = vmul.f32 %v107, %v107
  %v133 = vmul.f32 %v108, %v108
  %v134 = vmul.f32 %v109, %v109
  %v135 = vmul.f32 %v110, %v110
  %v136 = vmul.f32 %v111, %v111
  %v137 = vmul.f32 %v112, %v112
  %v138 = vmul.f32 %v113, %v113
  %v139 = vmul.f32 %v114, %v114
  %v140 = vmul.f32 %v115, %v115
  %v141 = vmul.f32 %v116, %v116
  %v142 = vmul.f32 %v117, %v117
  %v143 = vmul.f32 %v118, %v118
  %v144 = vmul.f32 %v119, %v119
  %v145 = vmul.f32 %v120, %v120
  %v146 = vmul.f32 %v121, %v121
  %v147 = vmul.f32 %v122, %v122
  %v148 = vmul.f32 %v123, %v123
  %v149 = vmul.f32 %v124, %v124
  %v150 = vmul.f32 %v125, %v125
  %v151 = vmul.f32 %v126, %v126
  %v152 = vmul.f32 %v127, %v127
  %v153 = vmul.f32 %v128, %v128
  %v154 = vsel %vm40, %v129, 0.0
  %v155 = vsel %vm40, %v130, 0.0
  %v156 = vadd.f32 %v154, %v155
  %v157 = vsel %vm40, %v131, 0.0
  %v158 = vadd.f32 %v156, %v157
  %v159 = vsel %vm40, %v132, 0.0
  %v160 = vadd.f32 %v158, %v159
  %v161 = vsel %vm40, %v133, 0.0
  %v162 = vadd.f32 %v160, %v161
  %v163 = vsel %vm40, %v134, 0.0
  %v164 = vadd.f32 %v162, %v163
  %v165 = vsel %vm40, %v135, 0.0
  %v166 = vadd.f32 %v164, %v165
  %v167 = vsel %vm40, %v136, 0.0
  %v168 = vadd.f32 %v166, %v167
  %v169 = vsel %vm40, %v137, 0.0
  %v170 = vadd.f32 %v168, %v169
  %v171 = vsel %vm40, %v138, 0.0
  %v172 = vadd.f32 %v170, %v171
  %v173 = vsel %vm40, %v139, 0.0
  %v174 = vadd.f32 %v172, %v173
  %v175 = vsel %vm40, %v140, 0.0
  %v176 = vadd.f32 %v174, %v175
  %v177 = vsel %vm40, %v141, 0.0
  %v178 = vadd.f32 %v176, %v177
  %v179 = vsel %vm40, %v142, 0.0
  %v180 = vadd.f32 %v178, %v179
  %v181 = vsel %vm40, %v143, 0.0
  %v182 = vadd.f32 %v180, %v181
  %v183 = vsel %vm40, %v144, 0.0
  %v184 = vadd.f32 %v182, %v183
  %v185 = vsel %vm40, %v145, 0.0
  %v186 = vadd.f32 %v184, %v185
  %v187 = vsel %vm40, %v146, 0.0
  %v188 = vadd.f32 %v186, %v187
  %v189 = vsel %vm40, %v147, 0.0
  %v190 = vadd.f32 %v188, %v189
  %v191 = vsel %vm40, %v148, 0.0
  %v192 = vadd.f32 %v190, %v191
  %v193 = vsel %vm40, %v149, 0.0
  %v194 = vadd.f32 %v192, %v193
  %v195 = vsel %vm40, %v150, 0.0
  %v196 = vadd.f32 %v194, %v195
  %v197 = vsel %vm40, %v151, 0.0
  %v198 = vadd.f32 %v196, %v197
  %v199 = vsel %vm40, %v152, 0.0
  %v200 = vadd.f32 %v198, %v199
  %v201 = vsel %vm40, %v153, 0.0
  %v202 = vadd.f32 %v200, %v201
  %v203 = vrot.slane %v202, 4
  %v204 = vadd.f32 %v202, %v203
  %v205 = vrot.slane %v204, 2
  %v206 = vadd.f32 %v204, %v205
  %v207 = vrot.slane %v206, 1
  %v208 = vadd.f32 %v206, %v207
  %v209 = vmul.f32 %v208, %v102
  %v210 = vld [vmem:[%s1] sm:$0x1]
  %v211 = vrsqrt.pop %v209
  %v212 = vmul.f32 %v211, %v209
  %v213 = vmul.f32 %v212, %v211
  %v214 = vmul.f32 0.5, %v213
  %v215 = vsub.f32 1.5, %v214
  %v216 = vmul.f32 %v211, %v215
  %vm217 = vweird.f32 %v209
  %vm218 = vweird.f32 %v211
  %vm219 = vmor %vm217, %vm218
  %v220 = vsel %vm219, %v211, %v216
  %v221 = vmul.f32 %v210, %v220
  %v223 = vperm.slane %v221, 0
  %v225 = vmul.f32 %v104, %v223
  %v226 = vmul.f32 %v105, %v223
  %v227 = vmul.f32 %v106, %v223
  %v228 = vmul.f32 %v107, %v223
  %v229 = vmul.f32 %v108, %v223
  %v230 = vmul.f32 %v109, %v223
  %v231 = vmul.f32 %v110, %v223
  %v232 = vmul.f32 %v111, %v223
  %v233 = vmul.f32 %v112, %v223
  %v234 = vmul.f32 %v113, %v223
  %v235 = vmul.f32 %v114, %v223
  %v236 = vmul.f32 %v115, %v223
  %v237 = vmul.f32 %v116, %v223
  %v238 = vmul.f32 %v117, %v223
  %v239 = vmul.f32 %v118, %v223
  %v240 = vmul.f32 %v119, %v223
  %v241 = vmul.f32 %v120, %v223
  %v242 = vmul.f32 %v121, %v223
  %v243 = vmul.f32 %v122, %v223
  %v244 = vmul.f32 %v123, %v223
  %v245 = vmul.f32 %v124, %v223
  %v246 = vmul.f32 %v125, %v223
  %v247 = vmul.f32 %v126, %v223
  %v248 = vmul.f32 %v127, %v223
  %v249 = vmul.f32 %v128, %v223
  %v250 = vsel %vm40, %v225, 0.0
  %251 = vadd.xlane.f32.xlu0 %v250
  %v252 = vpop.xlane.xlu0 %251
  %v253 = vsel %vm40, %v226, 0.0
  %254 = vadd.xlane.f32.xlu0 %v253
  %v255 = vpop.xlane.xlu0 %254
  %v256 = vsel %vm40, %v227, 0.0
  %257 = vadd.xlane.f32.xlu0 %v256
  %v258 = vpop.xlane.xlu0 %257
  %v259 = vsel %vm40, %v228, 0.0
  %260 = vadd.xlane.f32.xlu0 %v259
  %v261 = vpop.xlane.xlu0 %260
  %v262 = vsel %vm40, %v229, 0.0
  %263 = vadd.xlane.f32.xlu0 %v262
  %v264 = vpop.xlane.xlu0 %263
  %v265 = vsel %vm40, %v230, 0.0
  %266 = vadd.xlane.f32.xlu0 %v265
  %v267 = vpop.xlane.xlu0 %266
  %v268 = vsel %vm40, %v231, 0.0
  %269 = vadd.xlane.f32.xlu0 %v268
  %v270 = vpop.xlane.xlu0 %269
  %v271 = vsel %vm40, %v232, 0.0
  %272 = vadd.xlane.f32.xlu0 %v271
  %v273 = vpop.xlane.xlu0 %272
  %v274 = vsel %vm40, %v233, 0.0
  %275 = vadd.xlane.f32.xlu0 %v274
  %v276 = vpop.xlane.xlu0 %275
  %v277 = vsel %vm40, %v234, 0.0
  %278 = vadd.xlane.f32.xlu0 %v277
  %v279 = vpop.xlane.xlu0 %278
  %v280 = vsel %vm40, %v235, 0.0
  %281 = vadd.xlane.f32.xlu0 %v280
  %v282 = vpop.xlane.xlu0 %281
  %v283 = vsel %vm40, %v236, 0.0
  %284 = vadd.xlane.f32.xlu0 %v283
  %v285 = vpop.xlane.xlu0 %284
  %v286 = vsel %vm40, %v237, 0.0
  %287 = vadd.xlane.f32.xlu0 %v286
  %v288 = vpop.xlane.xlu0 %287
  %v289 = vsel %vm40, %v238, 0.0
  %290 = vadd.xlane.f32.xlu0 %v289
  %v291 = vpop.xlane.xlu0 %290
  %v292 = vsel %vm40, %v239, 0.0
  %293 = vadd.xlane.f32.xlu0 %v292
  %v294 = vpop.xlane.xlu0 %293
  %v295 = vsel %vm40, %v240, 0.0
  %296 = vadd.xlane.f32.xlu0 %v295
  %v297 = vpop.xlane.xlu0 %296
  %v298 = vsel %vm40, %v241, 0.0
  %299 = vadd.xlane.f32.xlu0 %v298
  %v300 = vpop.xlane.xlu0 %299
  %v301 = vsel %vm40, %v242, 0.0
  %302 = vadd.xlane.f32.xlu0 %v301
  %v303 = vpop.xlane.xlu0 %302
  %v304 = vsel %vm40, %v243, 0.0
  %305 = vadd.xlane.f32.xlu0 %v304
  %v306 = vpop.xlane.xlu0 %305
  %v307 = vsel %vm40, %v244, 0.0
  %308 = vadd.xlane.f32.xlu0 %v307
  %v309 = vpop.xlane.xlu0 %308
  %v310 = vsel %vm40, %v245, 0.0
  %311 = vadd.xlane.f32.xlu0 %v310
  %v312 = vpop.xlane.xlu0 %311
  %v313 = vsel %vm40, %v246, 0.0
  %314 = vadd.xlane.f32.xlu0 %v313
  %v315 = vpop.xlane.xlu0 %314
  %v316 = vsel %vm40, %v247, 0.0
  %317 = vadd.xlane.f32.xlu0 %v316
  %v318 = vpop.xlane.xlu0 %317
  %v319 = vsel %vm40, %v248, 0.0
  %320 = vadd.xlane.f32.xlu0 %v319
  %v321 = vpop.xlane.xlu0 %320
  %v322 = vsel %vm40, %v249, 0.0
  %323 = vadd.xlane.f32.xlu0 %v322
  %v324 = vpop.xlane.xlu0 %323
  %s325 = sld [smem:[#allocation2]]
  %v326 = vstv %s325
  %v327 = vadd.f32 %v252, %v326
  %v328 = vadd.f32 %v255, %v326
  %v329 = vadd.f32 %v258, %v326
  %v330 = vadd.f32 %v261, %v326
  %v331 = vadd.f32 %v264, %v326
  %v332 = vadd.f32 %v267, %v326
  %v333 = vadd.f32 %v270, %v326
  %v334 = vadd.f32 %v273, %v326
  %v335 = vadd.f32 %v276, %v326
  %v336 = vadd.f32 %v279, %v326
  %v337 = vadd.f32 %v282, %v326
  %v338 = vadd.f32 %v285, %v326
  %v339 = vadd.f32 %v288, %v326
  %v340 = vadd.f32 %v291, %v326
  %v341 = vadd.f32 %v294, %v326
  %v342 = vadd.f32 %v297, %v326
  %v343 = vadd.f32 %v300, %v326
  %v344 = vadd.f32 %v303, %v326
  %v345 = vadd.f32 %v306, %v326
  %v346 = vadd.f32 %v309, %v326
  %v347 = vadd.f32 %v312, %v326
  %v348 = vadd.f32 %v315, %v326
  %v349 = vadd.f32 %v318, %v326
  %v350 = vadd.f32 %v321, %v326
  %v351 = vadd.f32 %v324, %v326
  %vm352 = vcmask 7168
  %353 = vst.msk [vmem:[%s3] sm:$0xff] %vm352, %v327
  %354 = vst.msk [vmem:[%s3 + $0x8] sm:$0xff] %vm352, %v328
  %355 = vst.msk [vmem:[%s3 + $0x10] sm:$0xff] %vm352, %v329
  %356 = vst.msk [vmem:[%s3 + $0x18] sm:$0xff] %vm352, %v330
  %357 = vst.msk [vmem:[%s3 + $0x20] sm:$0xff] %vm352, %v331
  %358 = vst.msk [vmem:[%s3 + $0x28] sm:$0xff] %vm352, %v332
  %359 = vst.msk [vmem:[%s3 + $0x30] sm:$0xff] %vm352, %v333
  %360 = vst.msk [vmem:[%s3 + $0x38] sm:$0xff] %vm352, %v334
  %361 = vst.msk [vmem:[%s3 + $0x40] sm:$0xff] %vm352, %v335
  %362 = vst.msk [vmem:[%s3 + $0x48] sm:$0xff] %vm352, %v336
  %363 = vst.msk [vmem:[%s3 + $0x50] sm:$0xff] %vm352, %v337
  %364 = vst.msk [vmem:[%s3 + $0x58] sm:$0xff] %vm352, %v338
  %365 = vst.msk [vmem:[%s3 + $0x60] sm:$0xff] %vm352, %v339
  %366 = vst.msk [vmem:[%s3 + $0x68] sm:$0xff] %vm352, %v340
  %367 = vst.msk [vmem:[%s3 + $0x70] sm:$0xff] %vm352, %v341
  %368 = vst.msk [vmem:[%s3 + $0x78] sm:$0xff] %vm352, %v342
  %369 = vst.msk [vmem:[%s3 + $0x80] sm:$0xff] %vm352, %v343
  %370 = vst.msk [vmem:[%s3 + $0x88] sm:$0xff] %vm352, %v344
  %371 = vst.msk [vmem:[%s3 + $0x90] sm:$0xff] %vm352, %v345
  %372 = vst.msk [vmem:[%s3 + $0x98] sm:$0xff] %vm352, %v346
  %373 = vst.msk [vmem:[%s3 + $0xa0] sm:$0xff] %vm352, %v347
  %374 = vst.msk [vmem:[%s3 + $0xa8] sm:$0xff] %vm352, %v348
  %375 = vst.msk [vmem:[%s3 + $0xb0] sm:$0xff] %vm352, %v349
  %376 = vst.msk [vmem:[%s3 + $0xb8] sm:$0xff] %vm352, %v350
  %377 = vst.msk [vmem:[%s3 + $0xc0] sm:$0xff] %vm352, %v351
  // Predicated region
  $region14: #{tpu_custom_call.1} parent=0 // pred_check
    _
  $region15: #{tpu_custom_call.1} parent=0 // pred_check_branch
    %379 = sbr.rel (0) target = $region17
  $region16: #{tpu_custom_call.1} parent=0 // pred_region
    _
  $region17: #{tpu_custom_call.1} parent=0 // pred_fallthru
    _
  // Predicated region
  $region18: #{tpu_custom_call.1} parent=0 // pred_check
    _
  $region19: #{tpu_custom_call.1} parent=0 // pred_check_branch
    %381 = sbr.rel (0) target = $region21
  $region20: #{tpu_custom_call.1} parent=0 // pred_region
    _
  $region21: #{tpu_custom_call.1} parent=0 // pred_fallthru
    _

</llo_original>
